<compile_context>
chip_gen: v7x
topology: tpu7x:2x2x1
jax: 0.10.0
libtpu: 0.0.40
codegen_flags: <defaults>
</compile_context>

<pallas_src>
import functools

import jax
import jax.numpy as jnp
from jax.experimental import pallas as pl
from jax.experimental.pallas import tpu as pltpu


def _defocus_kernel(x_ref, band_ref, o_ref, *, k: int, out_h: int, tn: int):
    """One grid step processes `tn` whole images.

    x_ref:    (tn, H, W)          input planes, native dtype (cast to f32 here).
    band_ref: (W, out_w_pad) f32  column c holds 1/k^2 on rows c..c+k-1, 0 elsewhere
                                  (and 0 for pad columns c >= out_w).
    o_ref:    (tn, out_h, out_w_pad) f32, lane-dense padded output.
    """
    band = band_ref[...]
    for t in range(tn):  # static, unrolled
        xv = x_ref[t].astype(jnp.float32)  # (H, W)
        # Vertical pass: k sublane-shifted, full-width slices (only sublane offsets change).
        vsum = xv[0:out_h, :]
        for dy in range(1, k):
            vsum = vsum + xv[dy:dy + out_h, :]
        # Horizontal pass + 1/k^2 scaling + lane padding in one (otherwise idle) MXU matmul.
        o_ref[t] = jnp.dot(
            vsum, band, preferred_element_type=jnp.float32
        ).astype(o_ref.dtype)


def _pick_tn(n: int, per_img_bytes: int, band_bytes: int, budget_bytes: int) -> int:
    """Images per grid step: amortize step overhead, stay inside the VMEM budget
    (double-buffered in+out plus the band), keep >=2 grid steps when n >= 2
    (so both v7x TensorCores get work), and bound kernel unrolling."""
    avail = budget_bytes // 2 - band_bytes          # one copy of the double buffer
    tn = max(1, min(n, avail // max(per_img_bytes, 1)))
    tn = min(tn, max(1, (n + 1) // 2))              # leave >= 2 grid steps if possible
    tn = min(tn, 16)                                # bound static unroll
    while n % tn:                                   # clean divisor of n
        tn -= 1
    return int(tn)


def defocus_blur(x: jax.Array, blur_size: int) -> jax.Array:
    """Valid box-filter convolution with a (1,1,k,k) uniform kernel (groups=1).

    x: (N, C, H, W) with C == 1. Returns (N, 1, H-k+1, W-k+1) float32.
    """
    n, c, h, w = x.shape
    assert c == 1, "F.conv2d with weight (1,1,k,k), groups=1 requires 1 input channel"
    k = int(blur_size)
    out_h, out_w = h - k + 1, w - k + 1
    assert out_h > 0 and out_w > 0
    out_w_pad = ((out_w + 127) // 128) * 128

    # Banded horizontal-sum matrix (built once on host; DMA'd once per core since
    # its block index never changes).
    rows = jnp.arange(w, dtype=jnp.int32)[:, None]          # (W, 1)
    cols = jnp.arange(out_w_pad, dtype=jnp.int32)[None, :]  # (1, out_w_pad)
    band = (
        ((cols <= rows) & (rows < cols + k) & (cols < out_w)).astype(jnp.float32)
        / float(k * k)
    )

    in_bytes = h * w * x.dtype.itemsize
    out_bytes = out_h * out_w_pad * 4
    band_bytes = w * out_w_pad * 4
    tn = _pick_tn(n, in_bytes + out_bytes, band_bytes, budget_bytes=24 * 1024 * 1024)
    nb = n // tn

    x3 = x.reshape(n, h, w)  # squeeze the (asserted size-1) channel axis

    kernel = functools.partial(_defocus_kernel, k=k, out_h=out_h, tn=tn)

    out_pad = pl.pallas_call(
        kernel,
        out_shape=jax.ShapeDtypeStruct((n, out_h, out_w_pad), jnp.float32),
        grid_spec=pltpu.PrefetchScalarGridSpec(
            num_scalar_prefetch=0,
            grid=(nb,),
            in_specs=[
                pl.BlockSpec((tn, h, w), lambda i: (i, 0, 0)),
                pl.BlockSpec((w, out_w_pad), lambda i: (0, 0)),
            ],
            out_specs=pl.BlockSpec((tn, out_h, out_w_pad), lambda i: (i, 0, 0)),
        ),
        compiler_params=pltpu.CompilerParams(
            dimension_semantics=("parallel",),
            vmem_limit_bytes=32 * 1024 * 1024,
        ),
    )(x3, band)

    # Drop lane padding and restore the NCHW channel axis.
    return out_pad[:, :, :out_w].reshape(n, 1, out_h, out_w)


def defocus_blur_module(noised_and_cover, key):
    """Mirror of DefocusBlur.forward: element 0 is blurred with a randomly sized
    uniform kernel. blur_size determines output shapes -> sampled host-side."""
    blur_range = (5, 10)
    blur_size = int(jax.random.randint(key, (), blur_range[0], blur_range[1] + 1))
    noised_and_cover[0] = defocus_blur(noised_and_cover[0], blur_size)
    return noised_and_cover, blur_size


if __name__ == "__main__":
    key = jax.random.PRNGKey(0)
    k_img, k_blur = jax.random.split(key)

    # N=2, C=1 (required by the (1,1,k,k) weight), 16x16 spatial.
    x = jax.random.normal(k_img, (2, 1, 16, 16), dtype=jnp.float32)

    noised_and_cover, blur_size = defocus_blur_module([x], k_blur)
    out = jax.block_until_ready(noised_and_cover[0])

    # Reference check against plain-JAX valid box-filter convolution.
    kk = blur_size
    ref = jax.lax.conv_general_dilated(
        x,
        jnp.ones((1, 1, kk, kk), jnp.float32) / (kk * kk),
        window_strides=(1, 1),
        padding="VALID",
        dimension_numbers=("NCHW", "OIHW", "NCHW"),
    )
    assert out.shape == ref.shape, (out.shape, ref.shape)
    assert jnp.allclose(out, ref, atol=1e-5, rtol=1e-5)

    print("KERNEL_OK")
</pallas_src>

<mosaic_0001>
module attributes {stable_mosaic.version = 11 : i64} {
  func.func @_defocus_kernel(%arg0: i32, %arg1: memref<1x16x16xf32, #tpu.memory_space<vmem>>, %arg2: memref<16x128xf32, #tpu.memory_space<vmem>>, %arg3: memref<1x10x128xf32, #tpu.memory_space<vmem>>) attributes {dimension_semantics = [#tpu.dimension_semantics<parallel>], iteration_bounds = array<i64: 2>, scalar_prefetch = 0 : i64, scratch_operands = 0 : i64, tpu.core_type = #tpu.core_type<tc>, window_params = [{transform_indices = @transform_0, window_bounds = array<i64: 1, 16, 16>}, {pipeline_mode = #tpu.pipeline_mode<synchronous>, transform_indices = @transform_1, window_bounds = array<i64: 16, 128>}, {transform_indices = @transform_2, window_bounds = array<i64: 1, 10, 128>}]} {
    %c0 = arith.constant 0 : index
    %c0_0 = arith.constant 0 : index
    %0 = vector.load %arg2[%c0, %c0_0] : memref<16x128xf32, #tpu.memory_space<vmem>>, vector<16x128xf32>
    %c0_1 = arith.constant 0 : index
    %c0_2 = arith.constant 0 : index
    %c0_3 = arith.constant 0 : index
    %1 = vector.load %arg1[%c0_1, %c0_2, %c0_3] : memref<1x16x16xf32, #tpu.memory_space<vmem>>, vector<1x16x16xf32>
    %2 = vector.shape_cast %1 : vector<1x16x16xf32> to vector<16x16xf32>
    %3 = vector.extract_strided_slice %2 {offsets = [0, 0], sizes = [10, 16], strides = [1, 1]} : vector<16x16xf32> to vector<10x16xf32>
    %4 = vector.extract_strided_slice %2 {offsets = [1, 0], sizes = [10, 16], strides = [1, 1]} : vector<16x16xf32> to vector<10x16xf32>
    %5 = arith.addf %3, %4 : vector<10x16xf32>
    %6 = vector.extract_strided_slice %2 {offsets = [2, 0], sizes = [10, 16], strides = [1, 1]} : vector<16x16xf32> to vector<10x16xf32>
    %7 = arith.addf %5, %6 : vector<10x16xf32>
    %8 = vector.extract_strided_slice %2 {offsets = [3, 0], sizes = [10, 16], strides = [1, 1]} : vector<16x16xf32> to vector<10x16xf32>
    %9 = arith.addf %7, %8 : vector<10x16xf32>
    %10 = vector.extract_strided_slice %2 {offsets = [4, 0], sizes = [10, 16], strides = [1, 1]} : vector<16x16xf32> to vector<10x16xf32>
    %11 = arith.addf %9, %10 : vector<10x16xf32>
    %12 = vector.extract_strided_slice %2 {offsets = [5, 0], sizes = [10, 16], strides = [1, 1]} : vector<16x16xf32> to vector<10x16xf32>
    %13 = arith.addf %11, %12 : vector<10x16xf32>
    %14 = vector.extract_strided_slice %2 {offsets = [6, 0], sizes = [10, 16], strides = [1, 1]} : vector<16x16xf32> to vector<10x16xf32>
    %15 = arith.addf %13, %14 : vector<10x16xf32>
    %cst = arith.constant dense<0.000000e+00> : vector<10x128xf32>
    %16 = tpu.matmul %15, %0, %cst {dimension_numbers = #tpu.dot_dimension_numbers<[1], [0], [0], [1], [0, 0, 1, 1], [], []>} : vector<10x16xf32>, vector<16x128xf32>, vector<10x128xf32> -> vector<10x128xf32>
    %c0_4 = arith.constant 0 : index
    %c0_5 = arith.constant 0 : index
    %c0_6 = arith.constant 0 : index
    %17 = vector.load %arg3[%c0_4, %c0_5, %c0_6] : memref<1x10x128xf32, #tpu.memory_space<vmem>>, vector<1x10x128xf32>
    %18 = vector.shape_cast %17 : vector<1x10x128xf32> to vector<10x128xf32>
    %19 = vector.shape_cast %16 : vector<10x128xf32> to vector<1x10x128xf32>
    tpu.vector_store %arg3[%c0_4, %c0_5, %c0_6], %19 {strides = array<i32>} : memref<1x10x128xf32, #tpu.memory_space<vmem>>, vector<1x10x128xf32>,
    return
  }
  func.func @transform_0(%arg0: i32) -> (i32, i32, i32) {
    %c0_i32 = arith.constant 0 : i32
    %c0_i32_0 = arith.constant 0 : i32
    %c0_i32_1 = arith.constant 0 : i32
    return %arg0, %c0_i32, %c0_i32_0 : i32, i32, i32
  }
  func.func @transform_1(%arg0: i32) -> (i32, i32) {
    %c0_i32 = arith.constant 0 : i32
    %c0_i32_0 = arith.constant 0 : i32
    %c0_i32_1 = arith.constant 0 : i32
    return %c0_i32, %c0_i32_0 : i32, i32
  }
  func.func @transform_2(%arg0: i32) -> (i32, i32, i32) {
    %c0_i32 = arith.constant 0 : i32
    %c0_i32_0 = arith.constant 0 : i32
    %c0_i32_1 = arith.constant 0 : i32
    return %arg0, %c0_i32, %c0_i32_0 : i32, i32, i32
  }
}

</mosaic_0001>

<llo_original>
// kernel: tpu_custom_call.1
$region0: #{tpu_custom_call.1}
  #allocation0 [shape = 'u32[]', space=smem, size = 0x4, offset = 0x4, fixed_abs, tag = 'smem constant byte address 0x4 - core index']
  #allocation1 [shape = 'u32[144,128]{1,0:T(1,128)}', space=vmem, size = 0x12000, scoped, tag = 'internal scratch']
  %s0 = inlined_call_operand.hbm [shape: f32[2,16,16], index: 0, kind: input, shape index: {}]
  %s1 = inlined_call_operand.hbm [shape: f32[16,128], index: 1, kind: input, shape index: {}]
  %s2 = inlined_call_operand.vmem [shape: f32[2,10,128], index: 2, kind: output, shape index: {}]
  %s3 = sld [smem:[#allocation0]]
  $region49: #{tpu_custom_call.1} parent=0
    _
  %s5 = ssub.s32 1, %s3
  %s6 = scalar_select 0, %s5, %s3
  $region1: #{tpu_custom_call.1} parent=0
    #allocation2 [shape = 'u8[16384]{0}', space=vmem, size = 0x4000, scoped, tag = 'input window, operand 0']
    #allocation3 [shape = 's32[2]{0}', space=sflag, size = 0x8, scoped, tag = 'scoped memory for tpu_custom_call.1']
    #allocation4 [shape = 'u8[8192]{0}', space=vmem, size = 0x2000, scoped, tag = 'input window, operand 1, single buffered']
    #allocation5 [shape = 's32[1]{0}', space=sflag, size = 0x4, scoped, tag = 'scoped memory for tpu_custom_call.1']
    %7 = vsyncpa [#allocation3], 0
    %s8 = scalar_lea.sflag [#allocation3], 1
    %9 = vsyncpa %s8, 0
    %10 = vsyncpa [#allocation5], 0
    loop: start=0, step=1, limit=4
    $region2: #{tpu_custom_call.1} parent=1 // loop_pre_header
      _
    $region3: #{tpu_custom_call.1} parent=1 // loop_header
      %s12 = sphi 0, %s16
      %p13 = scmp.ge.s32.totalorder %s12, 4
      %s22 = sphi 0, %s24
      %s25 = sphi 0, %s22
      %s26 = sphi 0, %s25
      %s42 = sphi 0, %s26
      %s46 = sphi 0, %s46
      %s48 = sphi 0, %s46
      %s49 = sphi 0, %s48
      %s63 = sphi 0, %s49
      %s69 = sphi 0, %s71
      %s72 = sphi 0, %s69
      %s73 = sphi 0, %s72
      %s89 = sphi 0, %s73
    $region4: #{tpu_custom_call.1} parent=1 // loop_header_branch
      %15 = sbr.rel (%p13) target = $region8
    $region5: #{tpu_custom_call.1} parent=1 // loop_body
      %s17 = ssub.s32 %s12, 1
      %s18 = ssub.s32 %s12, 2
      %s19 = sadd.s32 %s12, 1
      %s20 = ssub.s32 %s12, %s19
      %p21 = scmp.eq.s32.totalorder %s20, 0
      %s23 = sadd.s32 %s22, 1
      %s24 = scalar_select %p21, %s22, %s23
      %p27 = pneg %p21
      %p28 = scmp.eq.s32.totalorder %s12, 1
      %p29 = por %p27, %p28
      %p30 = scmp.ne.s32.totalorder %s22, %s25
      %p31 = scmp.eq.s32.totalorder %s12, 0
      %p32 = por %p30, %p31
      %p33 = scmp.ne.s32.totalorder %s22, %s25
      %p34 = scmp.eq.s32.totalorder %s17, 1
      %p35 = por %p33, %p34
      %p36 = scmp.ne.s32.totalorder %s25, %s26
      %p37 = scmp.eq.s32.totalorder %s17, 0
      %p38 = por %p36, %p37
      %p39 = scmp.ne.s32.totalorder %s25, %s26
      %p40 = scmp.eq.s32.totalorder %s18, 1
      %p41 = por %p39, %p40
      %p43 = scmp.ne.s32.totalorder %s26, %s42
      %p44 = scmp.eq.s32.totalorder %s18, 0
      %p45 = por %p43, %p44
      %s47 = sadd.s32 %s46, 1
      %p50 = scmp.eq.s32.totalorder %s12, 1
      %p51 = scmp.ne.s32.totalorder %s46, %s48
      %p52 = scmp.eq.s32.totalorder %s12, 0
      %p53 = por %p51, %p52
      %p54 = scmp.ne.s32.totalorder %s46, %s48
      %p55 = scmp.eq.s32.totalorder %s17, 1
      %p56 = por %p54, %p55
      %p57 = scmp.ne.s32.totalorder %s48, %s49
      %p58 = scmp.eq.s32.totalorder %s17, 0
      %p59 = por %p57, %p58
      %p60 = scmp.ne.s32.totalorder %s48, %s49
      %p61 = scmp.eq.s32.totalorder %s18, 1
      %p62 = por %p60, %p61
      %p64 = scmp.ne.s32.totalorder %s49, %s63
      %p65 = scmp.eq.s32.totalorder %s18, 0
      %p66 = por %p64, %p65
      %s67 = ssub.s32 %s12, %s19
      %p68 = scmp.eq.s32.totalorder %s67, 0
      %s70 = sadd.s32 %s69, 1
      %s71 = scalar_select %p68, %s69, %s70
      %p74 = pneg %p68
      %p75 = scmp.eq.s32.totalorder %s12, 1
      %p76 = por %p74, %p75
      %p77 = scmp.ne.s32.totalorder %s69, %s72
      %p78 = scmp.eq.s32.totalorder %s12, 0
      %p79 = por %p77, %p78
      %p80 = scmp.ne.s32.totalorder %s69, %s72
      %p81 = scmp.eq.s32.totalorder %s17, 1
      %p82 = por %p80, %p81
      %p83 = scmp.ne.s32.totalorder %s72, %s73
      %p84 = scmp.eq.s32.totalorder %s17, 0
      %p85 = por %p83, %p84
      %p86 = scmp.ne.s32.totalorder %s72, %s73
      %p87 = scmp.eq.s32.totalorder %s18, 1
      %p88 = por %p86, %p87
      %p90 = scmp.ne.s32.totalorder %s73, %s89
      %p91 = scmp.eq.s32.totalorder %s18, 0
      %p92 = por %p90, %p91
      %p93 = scmp.le.s32.totalorder 1, %s12
      %p94 = scmp.lt.s32.totalorder %s12, 3
      %p95 = pnand %p93, %p94
      %p96 = pneg %p95
      // Predicated region
      $region9: #{tpu_custom_call.1} parent=5 // pred_check
        _
      $region10: #{tpu_custom_call.1} parent=5 // pred_check_branch
        %98 = sbr.rel (%p95) target = $region12
      $region11: #{tpu_custom_call.1} parent=5 // pred_region
        %s99 = ssub.s32 %s12, 1
        // Predicated region
        $region13: #{tpu_custom_call.1} parent=11 // pred_check
          %p100 = pneg %p59
        $region14: #{tpu_custom_call.1} parent=11 // pred_check_branch
          %102 = sbr.rel (%p100) target = $region16
        $region15: #{tpu_custom_call.1} parent=11 // pred_region
          %s104 = ssub.s32 256, 256
          %105 = vsyncadd [#allocation5], %s104
          %s106 = sshll.u32 [#allocation4], 4
          %s107 = int_to_ptr.vmem [resolvable:$true] %s106
          %112 = dma.hbm_to_vmem [thread:$0]  %s1, 256, %s107, [#allocation5], 128, 128, 8
        $region16: #{tpu_custom_call.1} parent=11 // pred_fallthru
          _
      $region12: #{tpu_custom_call.1} parent=5 // pred_fallthru
        _
      %p113 = scmp.lt.s32.totalorder %s12, 2
      // Predicated region
      $region17: #{tpu_custom_call.1} parent=5 // pred_check
        %p114 = pneg %p113
      $region18: #{tpu_custom_call.1} parent=5 // pred_check_branch
        %116 = sbr.rel (%p114) target = $region20
      $region19: #{tpu_custom_call.1} parent=5 // pred_region
        // Predicated region
        $region21: #{tpu_custom_call.1} parent=19 // pred_check
          %p117 = pneg %p32
        $region22: #{tpu_custom_call.1} parent=19 // pred_check_branch
          %119 = sbr.rel (%p117) target = $region24
        $region23: #{tpu_custom_call.1} parent=19 // pred_region
          %s120 = sand.u32 %s22, 1
          %s121 = scalar_lea.sflag [#allocation3], %s120
          %s122 = sand.u32 %s22, 1
          %s123 = smul.addr %s122, 16
          %s124 = scalar_lea.vmem [#allocation2], %s123
          %s126 = ssub.s32 256, 256
          %127 = vsyncadd %s121, %s126
          %s128 = smul.addr %s12, 2
          %s129 = smul.addr %s128, 128
          %s130 = scalar_lea.hbm %s0, %s129
          %s131 = sshll.u32 %s124, 4
          %s132 = int_to_ptr.vmem [resolvable:$true] %s131
          %137 = dma.hbm_to_vmem [thread:$0]  %s130, 256, %s132, %s121, 128, 128, 8
        $region24: #{tpu_custom_call.1} parent=19 // pred_fallthru
          _
      $region20: #{tpu_custom_call.1} parent=5 // pred_fallthru
        _
      %p138 = scmp.le.s32.totalorder 1, %s12
      %p139 = scmp.lt.s32.totalorder %s12, 3
      %p140 = pnand %p138, %p139
      %p141 = pneg %p140
      // Predicated region
      $region25: #{tpu_custom_call.1} parent=5 // pred_check
        _
      $region26: #{tpu_custom_call.1} parent=5 // pred_check_branch
        %143 = sbr.rel (%p140) target = $region28
      $region27: #{tpu_custom_call.1} parent=5 // pred_region
        %s144 = ssub.s32 %s12, 1
        %s145 = sand.u32 %s25, 1
        %s146 = scalar_lea.sflag [#allocation3], %s145
        %s147 = sand.u32 %s25, 1
        %s148 = smul.addr %s147, 16
        %s149 = scalar_lea.vmem [#allocation2], %s148
        // Predicated region
        $region29: #{tpu_custom_call.1} parent=27 // pred_check
          %p150 = pneg %p38
        $region30: #{tpu_custom_call.1} parent=27 // pred_check_branch
          %152 = sbr.rel (%p150) target = $region32
        $region31: #{tpu_custom_call.1} parent=27 // pred_region
          %153 = dma.done %s146, 256
        $region32: #{tpu_custom_call.1} parent=27 // pred_fallthru
          _
        // Predicated region
        $region33: #{tpu_custom_call.1} parent=27 // pred_check
          %p154 = pneg %p59
        $region34: #{tpu_custom_call.1} parent=27 // pred_check_branch
          %156 = sbr.rel (%p154) target = $region36
        $region35: #{tpu_custom_call.1} parent=27 // pred_region
          %157 = dma.done [#allocation5], 256
        $region36: #{tpu_custom_call.1} parent=27 // pred_fallthru
          _
        %s158 = sand.u32 %s25, 1
        %s159 = scalar_lea.sflag [#allocation3], %s158
        %s160 = sand.u32 %s25, 1
        %s161 = smul.addr %s160, 16
        %s162 = scalar_lea.vmem [#allocation2], %s161
        %p163 = pneg %p38
        %p164 = pneg %p35
        %p165 = pneg %p59
        %p166 = pneg %p56
        %p167 = pneg %p85
        %p168 = pneg %p82
        %p169 = scmp.lt.s32.totalorder %s17, 1
        %s170 = scalar_select %p169, %s17, 1
        %s171 = smul.addr %s170, 2
        %s172 = smul.addr %s171, 8
        %s173 = scalar_lea.vmem %s2, %s172
        %p174 = scmp.lt.s32.totalorder %s17, 1
        %s175 = scalar_select %p174, %s17, 1
        %s176 = smul.addr %s175, 2
        %s177 = smul.addr %s176, 8
        %s178 = scalar_lea.vmem %s2, %s177
        %v179 = vld [vmem:[#allocation4] sm:$0xff]
        %v180 = vld [vmem:[#allocation4 + $0x8] sm:$0xff]
        %v181 = vld [vmem:[%s149] sm:$0xff]
        %v182 = vld [vmem:[%s149 + $0x8] sm:$0xff]
        %vm185 = vcmask 1046528
        %v186 = vrot.slane %v181, 1
        %v187 = vrot.slane %v182, 1
        %v188 = vsel %vm185, %v186, %v187
        %v191 = vadd.f32 %v181, %v188
        %v192 = vadd.f32 %v182, %v187
        %vm193 = vcmask 1045504
        %v194 = vrot.slane %v181, 2
        %v195 = vrot.slane %v182, 2
        %v196 = vsel %vm193, %v194, %v195
        %v199 = vadd.f32 %v191, %v196
        %v200 = vadd.f32 %v192, %v195
        %vm201 = vcmask 1044480
        %v202 = vrot.slane %v181, 3
        %v203 = vrot.slane %v182, 3
        %v204 = vsel %vm201, %v202, %v203
        %v207 = vadd.f32 %v199, %v204
        %v208 = vadd.f32 %v200, %v203
        %vm209 = vcmask 1043456
        %v210 = vrot.slane %v181, 4
        %v211 = vrot.slane %v182, 4
        %v212 = vsel %vm209, %v210, %v211
        %v215 = vadd.f32 %v207, %v212
        %v216 = vadd.f32 %v208, %v211
        %vm217 = vcmask 1042432
        %v218 = vrot.slane %v181, 5
        %v219 = vrot.slane %v182, 5
        %v220 = vsel %vm217, %v218, %v219
        %v223 = vadd.f32 %v215, %v220
        %v224 = vadd.f32 %v216, %v219
        %vm225 = vcmask 1041408
        %v226 = vrot.slane %v181, 6
        %v227 = vrot.slane %v182, 6
        %v228 = vsel %vm225, %v226, %v227
        %v231 = vadd.f32 %v223, %v228
        %v232 = vadd.f32 %v224, %v227
        %vm233 = vcmask 130048
        %v235 = vsel %vm233, %v231, 0
        %v238 = vsel %vm233, %v232, 0
        %240 = vmatprep.subr.mxu0 0.0
        %241 = vmatpush1.msra.mxu0 %v179
        %242 = vmatprep.subr.mxu0 0.0
        %243 = vmatpush1.msra.mxu0 %v180
        %244 = vmatprep.subr.mxu0 0.0
        %245 = vmatpush1.msra.mxu0 0.0
        %246 = vmatprep.subr.mxu0 0.0
        %247 = vmatpush1.msra.mxu0 0.0
        %248 = vmatprep.subr.mxu0 0.0
        %249 = vmatpush1.msra.mxu0 0.0
        %250 = vmatprep.subr.mxu0 0.0
        %251 = vmatpush1.msra.mxu0 0.0
        %252 = vmatprep.subr.mxu0 0.0
        %253 = vmatpush1.msra.mxu0 0.0
        %254 = vmatprep.subr.mxu0 0.0
        %255 = vmatpush1.msra.mxu0 0.0
        %256 = vmatprep.subr.mxu0 0.0
        %257 = vmatpush1.msra.mxu0 0.0
        %258 = vmatprep.subr.mxu0 0.0
        %259 = vmatpush1.msra.mxu0 0.0
        %260 = vmatprep.subr.mxu0 0.0
        %261 = vmatpush1.msra.mxu0 0.0
        %262 = vmatprep.subr.mxu0 0.0
        %263 = vmatpush1.msra.mxu0 0.0
        %264 = vmatprep.subr.mxu0 0.0
        %265 = vmatpush1.msra.mxu0 0.0
        %266 = vmatprep.subr.mxu0 0.0
        %267 = vmatpush1.msra.mxu0 0.0
        %268 = vmatprep.subr.mxu0 0.0
        %269 = vmatpush1.msra.mxu0 0.0
        %270 = vmatprep.subr.mxu0 0.0
        %271 = vmatpush1.msra.mxu0 0.0
        %272 = vmatprep.subr.mxu0 0.0
        %273 = vmatpush1.msra.mxu0 0.0
        %274 = vmatprep.subr.mxu0 0.0
        %275 = vmatpush1.msra.mxu0 0.0
        %276 = vmatprep.subr.mxu0 0.0
        %277 = vmatpush1.msra.mxu0 0.0
        %278 = vmatprep.subr.mxu0 0.0
        %279 = vmatpush1.msra.mxu0 0.0
        %280 = vmatprep.subr.mxu0 0.0
        %281 = vmatpush1.msra.mxu0 0.0
        %282 = vmatprep.subr.mxu0 0.0
        %283 = vmatpush1.msra.mxu0 0.0
        %284 = vmatprep.subr.mxu0 0.0
        %285 = vmatpush1.msra.mxu0 0.0
        %286 = vmatprep.subr.mxu0 0.0
        %287 = vmatpush1.msra.mxu0 0.0
        %288 = vmatprep.subr.mxu0 0.0
        %289 = vmatpush1.msra.mxu0 0.0
        %290 = vmatprep.subr.mxu0 0.0
        %291 = vmatpush1.msra.mxu0 0.0
        %292 = vmatprep.subr.mxu0 0.0
        %293 = vmatpush1.msra.mxu0 0.0
        %294 = vmatprep.subr.mxu0 0.0
        %295 = vmatpush1.msra.mxu0 0.0
        %296 = vmatprep.subr.mxu0 0.0
        %297 = vmatpush1.msra.mxu0 0.0
        %298 = vmatprep.subr.mxu0 0.0
        %299 = vmatpush1.msra.mxu0 0.0
        %300 = vmatprep.subr.mxu0 0.0
        %301 = vmatpush1.msra.mxu0 0.0
        %302 = vmatprep.subr.mxu0 0.0
        %303 = vmatpush1.msra.mxu0 0.0
        %304 = vmatprep.mubr.f32.mxu0 0.0
        %305 = vmatmul.mubr.f32.gmra.mrb[0].mxu0 %v235
        %v306 = vpop.f32.mrb[0].mxu0
        %v307 = vadd.f32 0.0, %v306
        %v308 = vpop.f32.mrb[0].mxu0
        %309 = vmatprep.mubr.f32.mxu0 0.0
        %310 = vmatmul.mubr.f32.gmra.mrb[0].mxu0 %v238
        %v311 = vpop.f32.mrb[0].mxu0
        %v312 = vadd.f32 0.0, %v311
        %v313 = vpop.f32.mrb[0].mxu0
        %314 = vdwg.mxu0
        %315 = vst [vmem:[%s178] sm:$0xff] %v307
        %316 = vst [vmem:[%s178 + $0x8] sm:$0x3] %v312
        %p317 = scmp.lt.s32.totalorder %s17, 1
        %s318 = scalar_select %p317, %s17, 1
        %s319 = smul.addr %s318, 2
        %s320 = smul.addr %s319, 8
        %s321 = scalar_lea.vmem %s2, %s320
        // Predicated region
        $region37: #{tpu_custom_call.1} parent=27 // pred_check
          %p322 = pneg %p82
        $region38: #{tpu_custom_call.1} parent=27 // pred_check_branch
          %324 = sbr.rel (%p322) target = $region40
        $region39: #{tpu_custom_call.1} parent=27 // pred_region
          _
        $region40: #{tpu_custom_call.1} parent=27 // pred_fallthru
          _
      $region28: #{tpu_custom_call.1} parent=5 // pred_fallthru
        _
      %p325 = scmp.le.s32.totalorder 2, %s12
      // Predicated region
      $region41: #{tpu_custom_call.1} parent=5 // pred_check
        %p326 = pneg %p325
      $region42: #{tpu_custom_call.1} parent=5 // pred_check_branch
        %328 = sbr.rel (%p326) target = $region44
      $region43: #{tpu_custom_call.1} parent=5 // pred_region
        %s329 = ssub.s32 %s12, 2
        // Predicated region
        $region45: #{tpu_custom_call.1} parent=43 // pred_check
          %p330 = pneg %p88
        $region46: #{tpu_custom_call.1} parent=43 // pred_check_branch
          %332 = sbr.rel (%p330) target = $region48
        $region47: #{tpu_custom_call.1} parent=43 // pred_region
          %p333 = scmp.lt.s32.totalorder %s18, 1
          %s334 = scalar_select %p333, %s18, 1
          %s335 = smul.addr %s334, 2
          %s336 = smul.addr %s335, 8
          %s337 = scalar_lea.vmem %s2, %s336
        $region48: #{tpu_custom_call.1} parent=43 // pred_fallthru
          _
      $region44: #{tpu_custom_call.1} parent=5 // pred_fallthru
        _
    $region6: #{tpu_custom_call.1} parent=1 // loop_footer
      %s16 = sadd.s32 1, %s12
    $region7: #{tpu_custom_call.1} parent=1 // loop_footer_branch
      %11 = sbr.rel target = $region3
    $region8: #{tpu_custom_call.1} parent=1 // loop_exit
      _
    %338 = vsyncpa [#allocation3], 1
    %s339 = scalar_lea.sflag [#allocation3], 1
    %340 = vsyncpa %s339, 1
    %341 = vsyncpa [#allocation5], 1

</llo_original>
